<compile_context>
chip_gen: v6e
topology: v6e:2x2x1
jax: 0.10.0
libtpu: 0.0.40
codegen_flags: <defaults>
</compile_context>

<pallas_src>
import math
from functools import partial

import jax
import jax.numpy as jnp
from jax import lax
from jax.experimental import pallas as pl
from jax.experimental.pallas import tpu as pltpu

_MIB = 1024 * 1024


def _round_up(v, m):
    return ((v + m - 1) // m) * m


def _tpu_generation():
    """Best-effort TPU generation detection (wrapper-side heuristic only)."""
    try:
        kind = jax.devices()[0].device_kind.lower()
    except Exception:
        return "unknown"
    if "v5 lite" in kind or "v5e" in kind or "v5lite" in kind:
        return "v5e"
    if "v6" in kind:
        return "v6e"
    if "v7" in kind or "tpu7" in kind or kind.endswith("7x"):
        return "v7x"
    if "v5" in kind:              # v5p: 128 MiB-class VMEM, treat like v6e
        return "v6e"
    return "unknown"


# Per-generation knobs: lane cap per block, VMEM-estimate budget used for block
# selection, default scoped-VMEM limit, and the hard cap for vmem_limit_bytes
# (v7x per-TC physical VMEM is only 64 MiB -> leave headroom; v5e/v6e have 128 MiB).
_GEN_CFG = {
    "v5e":     dict(lane_cap=2048, budget=64 * _MIB, default_scoped=16 * _MIB, limit_cap=100 * _MIB),
    "v6e":     dict(lane_cap=2048, budget=64 * _MIB, default_scoped=32 * _MIB, limit_cap=100 * _MIB),
    "v7x":     dict(lane_cap=1024, budget=34 * _MIB, default_scoped=32 * _MIB, limit_cap=50 * _MIB),
    "unknown": dict(lane_cap=1024, budget=28 * _MIB, default_scoped=16 * _MIB, limit_cap=48 * _MIB),
}


def _select_bblk(B, C, vmem_of, lane_cap, budget, prefer_grid_ge2):
    """Largest batch-block (lane width) that fits the VMEM budget.
    Keeps the (8,128) BlockSpec rule: lane block valid iff Bblk == B (full dim)
    or Bblk*C % 128 == 0.  On v7x prefer grid >= 2 so both TensorCores work."""
    cands = [d for d in range(1, B + 1)
             if B % d == 0 and (d == B or (d * C) % 128 == 0)]
    fit = [d for d in cands if d * C <= lane_cap and vmem_of(d) <= budget]
    if not fit:
        fit = [d for d in cands if vmem_of(d) <= budget] or [min(cands)]
    if prefer_grid_ge2:
        ge2 = [d for d in fit if B // d >= 2]
        if ge2:
            return max(ge2)
    return max(fit)


def _invariant_spec(shape):
    """Grid-invariant constant: constant index_map (never re-fetched) and a
    single VMEM buffer instead of the default double-buffering."""
    try:
        return pl.BlockSpec(shape, lambda g: (0, 0), pipeline_mode=pl.Buffered(1))
    except Exception:  # very old jax without pipeline_mode / Buffered
        return pl.BlockSpec(shape, lambda g: (0, 0))


def _adaptive_spectral_kernel(thr_ref, fri_ref, w_ref, obd_ref, x_ref, o_ref,
                              *, F, Fp, n_even):
    f32 = jnp.float32

    # ---- fused rfft (norm='ortho'): [Fr; Fi] @ x -> [xr; xi]   (one MXU op)
    x_mm = x_ref[...].astype(fri_ref.dtype)                                # (N, BC)
    X = jnp.dot(fri_ref[...], x_mm, preferred_element_type=f32)            # (2Fp, BC)
    xr = X[:Fp, :]                         # tile-aligned static views (Fp % 8 == 0)
    xi = X[Fp:, :]

    wr, wi = w_ref[0:1, :], w_ref[1:2, :]                  # complex_weight      (1, BC)
    whr, whi = w_ref[2:3, :], w_ref[3:4, :]                # complex_weight_high (1, BC)

    # ---- per-batch spectral energy on the MXU: (Bblk, BC) . (Fp, BC)^T -> (Bblk, Fp)
    e_part = xr * xr + xi * xi                                              # (Fp, BC)
    ET = lax.dot_general(obd_ref[...], e_part, (((1,), (1,)), ((), ())),
                         preferred_element_type=f32)                        # (Bblk, Fp)

    # ---- torch lower-median via counting selection from a SINGLE compare tensor.
    # Padded frequencies are +inf: they never count below a real value and never
    # get selected (their n_lt == F > k).
    f_idx = lax.broadcasted_iota(jnp.int32, ET.shape, 1)
    ETv = jnp.where(f_idx < F, ET, jnp.inf)
    lt = (ETv[:, :, None] < ETv[:, None, :]).astype(jnp.int32)              # (Bblk, Fp, Fp)
    n_lt = jnp.sum(lt, axis=1)                  # strictly-below count per candidate
    n_le = Fp - jnp.sum(lt, axis=2)             # <= count (equivalent under +inf padding)
    k = (F - 1) // 2                            # torch lower-median rank
    is_med = jnp.logical_and(n_lt <= k, n_le >= k + 1)
    median = jnp.max(jnp.where(is_med, ETv, -jnp.inf), axis=1, keepdims=True)  # (Bblk, 1)
    # TODO(synk): for Fp >~ 512 (large N, esp. v7x's 64 MiB VMEM) chunk this counting
    # selection over frequency columns with a fori_loop instead of materialising the
    # full (Bblk, Fp, Fp) tensor.

    # ---- adaptive mask (straight-through trick is identity in the forward pass)
    thr = thr_ref[0]
    mask_bf = (ETv / (median + 1e-6) > thr).astype(f32)                     # (Bblk, Fp)
    # expand to the (Fp, BC) lane layout directly on the MXU (transposed-lhs contraction)
    mask = lax.dot_general(mask_bf, obd_ref[...], (((0,), (0,)), ((), ())),
                           preferred_element_type=f32)                      # (Fp, BC)

    # ---- fused spectral weighting: x_fft*W + (x_fft*mask)*W_high == x_fft*(W + mask*W_high)
    wcr = wr + mask * whr
    wci = wi + mask * whi
    yr = xr * wcr - xi * wci
    yi = xr * wci + xi * wcr

    # ---- fused irfft (norm='ortho') reusing the SAME DFT matrix:
    # out = Fr^T @ (cherm*yr) + Fi^T @ (cherm*yi), cherm = hermitian fold-back weights.
    fidx = lax.broadcasted_iota(jnp.int32, (Fp, 1), 0)
    cherm = jnp.where(fidx == 0, 1.0, 2.0).astype(f32)
    if n_even:
        cherm = jnp.where(fidx == F - 1, 1.0, cherm)
    yr_s = (yr * cherm).astype(fri_ref.dtype)
    yi_s = (yi * cherm).astype(fri_ref.dtype)
    cdims = (((0,), (0,)), ((), ()))
    out = lax.dot_general(fri_ref[:Fp, :], yr_s, cdims, preferred_element_type=f32)
    out = out + lax.dot_general(fri_ref[Fp:, :], yi_s, cdims, preferred_element_type=f32)
    o_ref[...] = out.astype(o_ref.dtype)


def adaptive_spectral_block(x, complex_weight, complex_weight_high, threshold_param,
                            *, dft_dtype=jnp.bfloat16):
    """TSLANet Adaptive_Spectral_Block forward.

    x: (B, N, C). Returns (B, N, C) in x.dtype.
    dft_dtype: bf16 by default (f32 accumulation) for ~2x MXU throughput and half the
    DFT-constant VMEM; pass jnp.float32 for exact parity with the torch f32 reference.
    """
    B, N, C = x.shape
    F = N // 2 + 1
    Fp = _round_up(F, 8)
    out_dtype = x.dtype

    in_item = jnp.dtype(x.dtype).itemsize
    out_item = jnp.dtype(out_dtype).itemsize
    dft_item = jnp.dtype(dft_dtype).itemsize

    gen = _tpu_generation()
    cfg = _GEN_CFG.get(gen, _GEN_CFG["unknown"])

    def vmem_of(bblk):
        bc = bblk * C
        const_b = 2 * Fp * N * dft_item + (4 + bblk) * bc * 4       # fri + wpack + obd
        block_b = 2 * N * bc * (in_item + out_item)                 # double-buffered x / out
        tmp_b = (7 * Fp * bc + N * bc) * 4 + 2 * Fp * bc * dft_item \
                + bblk * Fp * Fp * 4
        return const_b + block_b + tmp_b

    Bblk = _select_bblk(B, C, vmem_of, cfg["lane_cap"], cfg["budget"],
                        prefer_grid_ge2=(gen == "v7x"))
    BC = Bblk * C
    grid = (B // Bblk,)

    # ---- fused ortho rfft matrix [Fr; Fi] (padded to Fp rows, pads zeroed).
    # The irfft reuses this matrix via a transposed contraction + cherm row-scale.
    n = jnp.arange(N, dtype=jnp.float32)
    f = jnp.arange(Fp, dtype=jnp.float32)
    valid = (f < F).astype(jnp.float32)[:, None]                            # (Fp, 1)
    ang = 2.0 * math.pi * f[:, None] * n[None, :] / N                       # (Fp, N)
    scale = 1.0 / math.sqrt(N)
    fri = jnp.concatenate([jnp.cos(ang) * scale * valid,
                           -jnp.sin(ang) * scale * valid],
                          axis=0).astype(dft_dtype)                         # (2Fp, N)

    # ---- complex weights packed as rows (wr, wi, wr_high, wi_high), tiled over Bblk
    w = jnp.stack([complex_weight[:, 0], complex_weight[:, 1],
                   complex_weight_high[:, 0], complex_weight_high[:, 1]],
                  axis=0).astype(jnp.float32)                               # (4, C)
    wpack = jnp.tile(w, (1, Bblk))                                          # (4, BC)

    # ---- block-diagonal batch reducer/expander: obd[b, b*C + c] = 1
    lane_b = jnp.arange(BC, dtype=jnp.int32) // C
    obd = (lane_b[None, :] ==
           jnp.arange(Bblk, dtype=jnp.int32)[:, None]).astype(jnp.float32)  # (Bblk, BC)

    thr = jnp.asarray(threshold_param, jnp.float32).reshape((1,))

    # ---- lane-dense layout: (B, N, C) -> (N, B*C); native dtype (kernel up-casts).
    # TODO(synk): when C % 128 == 0, tile x directly as (Bblk, N, C) blocks
    # (dot_general contracting over N) and skip this transpose + its inverse,
    # saving two full HBM passes of B*N*C for mem-bound configs.
    x_t = jnp.transpose(x, (1, 0, 2)).reshape(N, B * C)

    # ---- per-generation scoped-VMEM limit (set early, well before the default is hit)
    vmem_est = vmem_of(Bblk)
    vmem_limit = None
    if vmem_est > 0.75 * cfg["default_scoped"]:
        vmem_limit = int(min(cfg["limit_cap"],
                             max(cfg["default_scoped"], 1.5 * vmem_est)))
        # TODO(synk): if 1.5*vmem_est exceeds limit_cap (very large N), switch to a
        # contraction-tiled DFT (extra "arbitrary" K grid axis + f32 VMEM accumulator)
        # instead of relying on this clamp.

    cost = pl.CostEstimate(
        flops=(8 * Fp * N * B * C            # rfft + irfft MXU matmuls
               + 4 * Bblk * Fp * B * C       # energy reduce + mask expand MXU
               + B * Fp * Fp                 # median counting compares
               + 16 * Fp * B * C),           # spectral weighting (VPU)
        transcendentals=0,
        bytes_accessed=(B * N * C * (in_item + out_item)
                        + 2 * Fp * N * dft_item + (4 + Bblk) * BC * 4 + 4))

    kernel = partial(_adaptive_spectral_kernel, F=F, Fp=Fp, n_even=(N % 2 == 0))
    out_t = pl.pallas_call(
        kernel,
        out_shape=jax.ShapeDtypeStruct((N, B * C), out_dtype),
        grid_spec=pltpu.PrefetchScalarGridSpec(
            num_scalar_prefetch=0,
            grid=grid,
            in_specs=[
                pl.BlockSpec(memory_space=pltpu.MemorySpace.SMEM),   # threshold scalar
                _invariant_spec((2 * Fp, N)),                        # fused rfft/irfft DFT matrix
                _invariant_spec((4, BC)),                            # packed complex weights
                _invariant_spec((Bblk, BC)),                         # block-diag batch reducer
                pl.BlockSpec((N, BC), lambda g: (0, g)),             # x (Bblk batches / step)
            ],
            out_specs=pl.BlockSpec((N, BC), lambda g: (0, g)),
        ),
        compiler_params=pltpu.CompilerParams(
            dimension_semantics=("parallel",),   # batch-block axis (shards across TCs on v7x)
            vmem_limit_bytes=vmem_limit),
        cost_estimate=cost,
    )(thr, fri, wpack, obd, x_t)

    # undo the wrapper-side lane folding: (N, B*C) -> (B, N, C)
    return out_t.reshape(N, B, C).transpose(1, 0, 2)


if __name__ == "__main__":
    key = jax.random.PRNGKey(0)
    k1, k2, k3, k4 = jax.random.split(key, 4)

    B, N, C = 2, 8, 32          # batch=2, seq=8, dim=32 -> F = N//2 + 1 = 5, Fp = 8
    x = jax.random.normal(k1, (B, N, C), dtype=jnp.float32)

    # Deterministic parameter init mirroring __init__ (trunc_normal std=0.02, rand(1)).
    complex_weight = jax.random.truncated_normal(k2, -2.0, 2.0, (C, 2), jnp.float32) * 0.02
    complex_weight_high = jax.random.truncated_normal(k3, -2.0, 2.0, (C, 2), jnp.float32) * 0.02
    threshold_param = jax.random.uniform(k4, (1,), jnp.float32)

    out = adaptive_spectral_block(x, complex_weight, complex_weight_high, threshold_param)
    jax.block_until_ready(out)
    assert out.shape == (B, N, C) and out.dtype == x.dtype
    print("KERNEL_OK")
</pallas_src>

<mosaic_0001>
module attributes {stable_mosaic.version = 11 : i64} {
  func.func @_adaptive_spectral_kernel(%arg0: i32, %arg1: memref<1xf32, #tpu.memory_space<smem>>, %arg2: memref<16x8xbf16, #tpu.memory_space<vmem>>, %arg3: memref<4x64xf32, #tpu.memory_space<vmem>>, %arg4: memref<2x64xf32, #tpu.memory_space<vmem>>, %arg5: memref<8x64xf32, #tpu.memory_space<vmem>>, %arg6: memref<8x64xf32, #tpu.memory_space<vmem>>) attributes {dimension_semantics = [#tpu.dimension_semantics<parallel>], iteration_bounds = array<i64: 1>, scalar_prefetch = 0 : i64, scratch_operands = 0 : i64, tpu.core_type = #tpu.core_type<tc>, window_params = [{transform_indices = @transform_0, window_bounds = array<i64: 1>}, {pipeline_mode = #tpu.pipeline_mode<synchronous>, transform_indices = @transform_1, window_bounds = array<i64: 16, 8>}, {pipeline_mode = #tpu.pipeline_mode<synchronous>, transform_indices = @transform_2, window_bounds = array<i64: 4, 64>}, {pipeline_mode = #tpu.pipeline_mode<synchronous>, transform_indices = @transform_3, window_bounds = array<i64: 2, 64>}, {transform_indices = @transform_4, window_bounds = array<i64: 8, 64>}, {transform_indices = @transform_5, window_bounds = array<i64: 8, 64>}]} {
    %c0 = arith.constant 0 : index
    %c0_0 = arith.constant 0 : index
    %0 = vector.load %arg5[%c0, %c0_0] : memref<8x64xf32, #tpu.memory_space<vmem>>, vector<8x64xf32>
    %1 = arith.truncf %0 : vector<8x64xf32> to vector<8x64xbf16>
    %c0_1 = arith.constant 0 : index
    %c0_2 = arith.constant 0 : index
    %2 = vector.load %arg2[%c0_1, %c0_2] : memref<16x8xbf16, #tpu.memory_space<vmem>>, vector<16x8xbf16>
    %cst = arith.constant dense<0.000000e+00> : vector<16x64xf32>
    %3 = tpu.matmul %2, %1, %cst {dimension_numbers = #tpu.dot_dimension_numbers<[1], [0], [0], [1], [0, 0, 1, 1], [], []>} : vector<16x8xbf16>, vector<8x64xbf16>, vector<16x64xf32> -> vector<16x64xf32>
    %4 = vector.extract_strided_slice %3 {offsets = [0, 0], sizes = [8, 64], strides = [1, 1]} : vector<16x64xf32> to vector<8x64xf32>
    %5 = vector.extract_strided_slice %3 {offsets = [8, 0], sizes = [8, 64], strides = [1, 1]} : vector<16x64xf32> to vector<8x64xf32>
    %c0_3 = arith.constant 0 : index
    %c0_4 = arith.constant 0 : index
    %6 = vector.load %arg3[%c0_3, %c0_4] : memref<4x64xf32, #tpu.memory_space<vmem>>, vector<1x64xf32>
    %c1 = arith.constant 1 : index
    %c0_5 = arith.constant 0 : index
    %7 = vector.load %arg3[%c1, %c0_5] : memref<4x64xf32, #tpu.memory_space<vmem>>, vector<1x64xf32>
    %c2 = arith.constant 2 : index
    %c0_6 = arith.constant 0 : index
    %8 = vector.load %arg3[%c2, %c0_6] : memref<4x64xf32, #tpu.memory_space<vmem>>, vector<1x64xf32>
    %c3 = arith.constant 3 : index
    %c0_7 = arith.constant 0 : index
    %9 = vector.load %arg3[%c3, %c0_7] : memref<4x64xf32, #tpu.memory_space<vmem>>, vector<1x64xf32>
    %10 = arith.mulf %4, %4 : vector<8x64xf32>
    %11 = arith.mulf %5, %5 : vector<8x64xf32>
    %12 = arith.addf %10, %11 : vector<8x64xf32>
    %c0_8 = arith.constant 0 : index
    %c0_9 = arith.constant 0 : index
    %13 = vector.load %arg4[%c0_8, %c0_9] : memref<2x64xf32, #tpu.memory_space<vmem>>, vector<2x64xf32>
    %cst_10 = arith.constant dense<0.000000e+00> : vector<2x8xf32>
    %14 = tpu.matmul %13, %12, %cst_10 {dimension_numbers = #tpu.dot_dimension_numbers<[1], [1], [0], [0], [0, 0, 1, 0], [], []>} : vector<2x64xf32>, vector<8x64xf32>, vector<2x8xf32> -> vector<2x8xf32>
    %15 = tpu.iota {dimensions = array<i32: 1>} : vector<2x8xi32>
    %c5_i32 = arith.constant 5 : i32
    %16 = vector.broadcast %c5_i32 : i32 to vector<2x8xi32>
    %17 = arith.cmpi slt, %15, %16 : vector<2x8xi32>
    %cst_11 = arith.constant 0x7F800000 : f32
    %18 = vector.broadcast %cst_11 : f32 to vector<2x8xf32>
    %19 = arith.select %17, %14, %18 : vector<2x8xi1>, vector<2x8xf32>
    %20 = vector.shape_cast %19 : vector<2x8xf32> to vector<2x8x1xf32>
    %21 = vector.shape_cast %19 : vector<2x8xf32> to vector<2x1x8xf32>
    %22 = vector.broadcast %20 : vector<2x8x1xf32> to vector<2x8x8xf32>
    %23 = vector.broadcast %21 : vector<2x1x8xf32> to vector<2x8x8xf32>
    %24 = arith.cmpf olt, %22, %23 : vector<2x8x8xf32>
    %25 = arith.extui %24 : vector<2x8x8xi1> to vector<2x8x8xi32>
    %cst_12 = arith.constant dense<0> : vector<2x8xi32>
    %26 = vector.multi_reduction <add>, %25, %cst_12 [1] : vector<2x8x8xi32> to vector<2x8xi32>
    %cst_13 = arith.constant dense<0> : vector<2x8xi32>
    %27 = vector.multi_reduction <add>, %25, %cst_13 [2] : vector<2x8x8xi32> to vector<2x8xi32>
    %c8_i32 = arith.constant 8 : i32
    %28 = vector.broadcast %c8_i32 : i32 to vector<2x8xi32>
    %29 = arith.subi %28, %27 : vector<2x8xi32>
    %c2_i32 = arith.constant 2 : i32
    %30 = vector.broadcast %c2_i32 : i32 to vector<2x8xi32>
    %31 = arith.cmpi sle, %26, %30 : vector<2x8xi32>
    %c3_i32 = arith.constant 3 : i32
    %32 = vector.broadcast %c3_i32 : i32 to vector<2x8xi32>
    %33 = arith.cmpi sge, %29, %32 : vector<2x8xi32>
    %34 = arith.andi %31, %33 : vector<2x8xi1>
    %cst_14 = arith.constant 0xFF800000 : f32
    %35 = vector.broadcast %cst_14 : f32 to vector<2x8xf32>
    %36 = arith.select %34, %19, %35 : vector<2x8xi1>, vector<2x8xf32>
    %cst_15 = arith.constant dense<0xFF800000> : vector<2xf32>
    %37 = vector.multi_reduction <maximumf>, %36, %cst_15 [1] : vector<2x8xf32> to vector<2xf32>
    %38 = vector.shape_cast %37 : vector<2xf32> to vector<2x1xf32>
    %c0_16 = arith.constant 0 : index
    %39 = memref.load %arg1[%c0_16] : memref<1xf32, #tpu.memory_space<smem>>
    %cst_17 = arith.constant 9.99999997E-7 : f32
    %40 = vector.broadcast %cst_17 : f32 to vector<2x1xf32>
    %41 = arith.addf %38, %40 : vector<2x1xf32>
    %42 = vector.broadcast %41 : vector<2x1xf32> to vector<2x8xf32>
    %43 = arith.divf %19, %42 : vector<2x8xf32>
    %44 = vector.broadcast %39 : f32 to vector<2x8xf32>
    %45 = arith.cmpf ogt, %43, %44 : vector<2x8xf32>
    %46 = arith.extui %45 : vector<2x8xi1> to vector<2x8xi32>
    %47 = arith.sitofp %46 : vector<2x8xi32> to vector<2x8xf32>
    %c0_18 = arith.constant 0 : index
    %c0_19 = arith.constant 0 : index
    %48 = vector.load %arg4[%c0_18, %c0_19] : memref<2x64xf32, #tpu.memory_space<vmem>>, vector<2x64xf32>
    %cst_20 = arith.constant dense<0.000000e+00> : vector<8x64xf32>
    %49 = tpu.matmul %47, %48, %cst_20 {dimension_numbers = #tpu.dot_dimension_numbers<[0], [0], [1], [1], [0, 1, 1, 1], [], []>} : vector<2x8xf32>, vector<2x64xf32>, vector<8x64xf32> -> vector<8x64xf32>
    %50 = vector.broadcast %8 : vector<1x64xf32> to vector<8x64xf32>
    %51 = arith.mulf %49, %50 : vector<8x64xf32>
    %52 = vector.broadcast %6 : vector<1x64xf32> to vector<8x64xf32>
    %53 = arith.addf %52, %51 : vector<8x64xf32>
    %54 = vector.broadcast %9 : vector<1x64xf32> to vector<8x64xf32>
    %55 = arith.mulf %49, %54 : vector<8x64xf32>
    %56 = vector.broadcast %7 : vector<1x64xf32> to vector<8x64xf32>
    %57 = arith.addf %56, %55 : vector<8x64xf32>
    %58 = arith.mulf %4, %53 : vector<8x64xf32>
    %59 = arith.mulf %5, %57 : vector<8x64xf32>
    %60 = arith.subf %58, %59 : vector<8x64xf32>
    %61 = arith.mulf %4, %57 : vector<8x64xf32>
    %62 = arith.mulf %5, %53 : vector<8x64xf32>
    %63 = arith.addf %61, %62 : vector<8x64xf32>
    %64 = tpu.iota {dimensions = array<i32: 0>} : vector<8x1xi32>
    %c0_i32 = arith.constant 0 : i32
    %65 = vector.broadcast %c0_i32 : i32 to vector<8x1xi32>
    %66 = arith.cmpi eq, %64, %65 : vector<8x1xi32>
    %cst_21 = arith.constant 1.000000e+00 : f32
    %cst_22 = arith.constant 2.000000e+00 : f32
    %67 = vector.broadcast %cst_21 : f32 to vector<8x1xf32>
    %68 = vector.broadcast %cst_22 : f32 to vector<8x1xf32>
    %69 = arith.select %66, %67, %68 : vector<8x1xi1>, vector<8x1xf32>
    %c4_i32 = arith.constant 4 : i32
    %70 = vector.broadcast %c4_i32 : i32 to vector<8x1xi32>
    %71 = arith.cmpi eq, %64, %70 : vector<8x1xi32>
    %cst_23 = arith.constant 1.000000e+00 : f32
    %72 = vector.broadcast %cst_23 : f32 to vector<8x1xf32>
    %73 = arith.select %71, %72, %69 : vector<8x1xi1>, vector<8x1xf32>
    %74 = vector.broadcast %73 : vector<8x1xf32> to vector<8x64xf32>
    %75 = arith.mulf %60, %74 : vector<8x64xf32>
    %76 = arith.truncf %75 : vector<8x64xf32> to vector<8x64xbf16>
    %77 = vector.broadcast %73 : vector<8x1xf32> to vector<8x64xf32>
    %78 = arith.mulf %63, %77 : vector<8x64xf32>
    %79 = arith.truncf %78 : vector<8x64xf32> to vector<8x64xbf16>
    %c0_24 = arith.constant 0 : index
    %c0_25 = arith.constant 0 : index
    %80 = vector.load %arg2[%c0_24, %c0_25] : memref<16x8xbf16, #tpu.memory_space<vmem>>, vector<8x8xbf16>
    %cst_26 = arith.constant dense<0.000000e+00> : vector<8x64xf32>
    %81 = tpu.matmul %80, %76, %cst_26 {dimension_numbers = #tpu.dot_dimension_numbers<[0], [0], [1], [1], [0, 1, 1, 1], [], []>} : vector<8x8xbf16>, vector<8x64xbf16>, vector<8x64xf32> -> vector<8x64xf32>
    %c8 = arith.constant 8 : index
    %c0_27 = arith.constant 0 : index
    %82 = vector.load %arg2[%c8, %c0_27] : memref<16x8xbf16, #tpu.memory_space<vmem>>, vector<8x8xbf16>
    %cst_28 = arith.constant dense<0.000000e+00> : vector<8x64xf32>
    %83 = tpu.matmul %82, %79, %cst_28 {dimension_numbers = #tpu.dot_dimension_numbers<[0], [0], [1], [1], [0, 1, 1, 1], [], []>} : vector<8x8xbf16>, vector<8x64xbf16>, vector<8x64xf32> -> vector<8x64xf32>
    %84 = arith.addf %81, %83 : vector<8x64xf32>
    %c0_29 = arith.constant 0 : index
    %c0_30 = arith.constant 0 : index
    %85 = vector.load %arg6[%c0_29, %c0_30] : memref<8x64xf32, #tpu.memory_space<vmem>>, vector<8x64xf32>
    tpu.vector_store %arg6[%c0_29, %c0_30], %84 {strides = array<i32>} : memref<8x64xf32, #tpu.memory_space<vmem>>, vector<8x64xf32>,
    return
  }
  func.func @transform_0(%arg0: i32) -> i32 {
    %c0_i32 = arith.constant 0 : i32
    %c0_i32_0 = arith.constant 0 : i32
    return %c0_i32 : i32
  }
  func.func @transform_1(%arg0: i32) -> (i32, i32) {
    %c0_i32 = arith.constant 0 : i32
    %c0_i32_0 = arith.constant 0 : i32
    %c0_i32_1 = arith.constant 0 : i32
    return %c0_i32, %c0_i32_0 : i32, i32
  }
  func.func @transform_2(%arg0: i32) -> (i32, i32) {
    %c0_i32 = arith.constant 0 : i32
    %c0_i32_0 = arith.constant 0 : i32
    %c0_i32_1 = arith.constant 0 : i32
    return %c0_i32, %c0_i32_0 : i32, i32
  }
  func.func @transform_3(%arg0: i32) -> (i32, i32) {
    %c0_i32 = arith.constant 0 : i32
    %c0_i32_0 = arith.constant 0 : i32
    %c0_i32_1 = arith.constant 0 : i32
    return %c0_i32, %c0_i32_0 : i32, i32
  }
  func.func @transform_4(%arg0: i32) -> (i32, i32) {
    %c0_i32 = arith.constant 0 : i32
    %c0_i32_0 = arith.constant 0 : i32
    return %c0_i32, %arg0 : i32, i32
  }
  func.func @transform_5(%arg0: i32) -> (i32, i32) {
    %c0_i32 = arith.constant 0 : i32
    %c0_i32_0 = arith.constant 0 : i32
    return %c0_i32, %arg0 : i32, i32
  }
}

</mosaic_0001>

<llo_original>
// kernel: tpu_custom_call.1
$region0: #{tpu_custom_call.1}
  #allocation0 [shape = 'u32[]', space=smem, size = 0x4, offset = 0x4, fixed_abs, tag = 'smem constant byte address 0x4 - core index']
  #allocation1 [shape = 'u32[144,128]{1,0:T(1,128)}', space=vmem, size = 0x12000, scoped, tag = 'internal scratch']
  #allocation2 [shape = 'f32[1]{0:T(128)S(6)}', space=smem, size = 0x200, scoped, tag = 'scoped memory for tpu_custom_call.1']
  %s0 = inlined_call_operand.<no memory space> [shape: f32[1], index: 0, kind: input, shape index: {}]
  %s1 = inlined_call_operand.vmem [shape: bf16[16,8], index: 1, kind: input, shape index: {}]
  %s2 = inlined_call_operand.vmem [shape: f32[4,64], index: 2, kind: input, shape index: {}]
  %s3 = inlined_call_operand.vmem [shape: f32[2,64], index: 3, kind: input, shape index: {}]
  %s4 = inlined_call_operand.vmem [shape: f32[8,64], index: 4, kind: input, shape index: {}]
  %s5 = inlined_call_operand.hbm [shape: f32[8,64], index: 5, kind: output, shape index: {}]
  %s6 = sld [smem:[#allocation0]]
  $region30: #{tpu_custom_call.1} parent=0
    _
  %s8 = ssub.s32 1, %s6
  %s9 = scalar_select 0, %s8, %s6
  %10 = sst [smem:[#allocation2]] %s0
  $region1: #{tpu_custom_call.1} parent=0
    #allocation3 [shape = 'u8[4096]{0}', space=vmem, size = 0x1000, scoped, tag = 'output window, operand 0, single buffered']
    #allocation4 [shape = 's32[1]{0}', space=sflag, size = 0x4, scoped, tag = 'scoped memory for tpu_custom_call.1']
    %11 = vsyncpa [#allocation4], 0
    // Predicated region
    $region2: #{tpu_custom_call.1} parent=1 // pred_check
      _
    $region3: #{tpu_custom_call.1} parent=1 // pred_check_branch
      %13 = sbr.rel (0) target = $region5
    $region4: #{tpu_custom_call.1} parent=1 // pred_region
      _
    $region5: #{tpu_custom_call.1} parent=1 // pred_fallthru
      _
    // Predicated region
    $region6: #{tpu_custom_call.1} parent=1 // pred_check
      _
    $region7: #{tpu_custom_call.1} parent=1 // pred_check_branch
      %15 = sbr.rel (0) target = $region9
    $region8: #{tpu_custom_call.1} parent=1 // pred_region
      _
    $region9: #{tpu_custom_call.1} parent=1 // pred_fallthru
      _
    // Predicated region
    $region10: #{tpu_custom_call.1} parent=1 // pred_check
      _
    $region11: #{tpu_custom_call.1} parent=1 // pred_check_branch
      %17 = sbr.rel (0) target = $region13
    $region12: #{tpu_custom_call.1} parent=1 // pred_region
      _
    $region13: #{tpu_custom_call.1} parent=1 // pred_fallthru
      _
    // Predicated region
    $region14: #{tpu_custom_call.1} parent=1 // pred_check
      _
    $region15: #{tpu_custom_call.1} parent=1 // pred_check_branch
      %19 = sbr.rel (0) target = $region17
    $region16: #{tpu_custom_call.1} parent=1 // pred_region
      _
    $region17: #{tpu_custom_call.1} parent=1 // pred_fallthru
      _
    // Predicated region
    $region18: #{tpu_custom_call.1} parent=1 // pred_check
      _
    $region19: #{tpu_custom_call.1} parent=1 // pred_check_branch
      %21 = sbr.rel (0) target = $region21
    $region20: #{tpu_custom_call.1} parent=1 // pred_region
      _
    $region21: #{tpu_custom_call.1} parent=1 // pred_fallthru
      _
    %v23 = vld [vmem:[%s4] sm:$0xff]
    %v24 = vpack.c.bf16 %v23, %v23
    %v25 = vld [vmem:[%s1] sm:$0xf]
    %v26 = vld [vmem:[%s1 + $0x4] sm:$0xf]
    %v29 = vunpack.c.l.b16 %v25
    %v30 = vunpack.c.l.b16 %v26
    %v31 = vpack.c.b16 %v30, %v29
    %vm32 = vcmask 64512
    %v34 = vsel %vm32, %v31, 0
    %vm36 = vcmask 1043456
    %v38 = vsel %vm36, %v24, 0
    %40 = vmatprep.subr.bf16.mxu0 0
    %41 = vmatpush1.bf16.msra.mxu0 0
    %42 = vmatprep.subr.bf16.mxu0 0
    %43 = vmatpush1.bf16.msra.mxu0 0
    %44 = vmatprep.subr.bf16.mxu0 0
    %45 = vmatpush1.bf16.msra.mxu0 0
    %46 = vmatprep.subr.bf16.mxu0 0
    %47 = vmatpush1.bf16.msra.mxu0 0
    %48 = vmatprep.subr.bf16.mxu0 0
    %49 = vmatpush1.bf16.msra.mxu0 0
    %50 = vmatprep.subr.bf16.mxu0 0
    %51 = vmatpush1.bf16.msra.mxu0 0
    %52 = vmatprep.subr.bf16.mxu0 0
    %53 = vmatpush1.bf16.msra.mxu0 0
    %54 = vmatprep.subr.bf16.mxu0 0
    %55 = vmatpush1.bf16.msra.mxu0 %v38
    %56 = vmatprep.subr.bf16.mxu0 0
    %57 = vmatpush2.bf16.msra.mxu0 0
    %58 = vmatprep.subr.bf16.mxu0 0
    %59 = vmatpush2.bf16.msra.mxu0 0
    %60 = vmatprep.subr.bf16.mxu0 0
    %61 = vmatpush2.bf16.msra.mxu0 0
    %62 = vmatprep.subr.bf16.mxu0 0
    %63 = vmatpush2.bf16.msra.mxu0 0
    %64 = vmatprep.subr.bf16.mxu0 0
    %65 = vmatpush2.bf16.msra.mxu0 0
    %66 = vmatprep.subr.bf16.mxu0 0
    %67 = vmatpush2.bf16.msra.mxu0 0
    %68 = vmatprep.subr.bf16.mxu0 0
    %69 = vmatpush2.bf16.msra.mxu0 0
    %70 = vmatprep.subr.bf16.mxu0 0
    %71 = vmatpush2.bf16.msra.mxu0 0
    %72 = vmatprep.mubr.bf16.mxu0 0
    %73 = vmatmul.mubr.bf16.gmra.mxu0 %v34
    %v74 = vpop.f32.mrf.mxu0
    %v75 = vadd.f32 0.0, %v74
    %v76 = vpop.f32.mrf.mxu0
    %v77 = vpop.f32.mrf.mxu0
    %v78 = vadd.f32 0.0, %v77
    %v79 = vpop.f32.mrf.mxu0
    %80 = vdwg.mxu0
    %v81 = vld [vmem:[%s2] sm:$0x1]
    %v82 = vld [vmem:[%s2 + $0x1] sm:$0x1]
    %v83 = vld [vmem:[%s2 + $0x2] sm:$0x1]
    %v84 = vld [vmem:[%s2 + $0x3] sm:$0x1]
    %v85 = vmul.f32 %v75, %v75
    %v86 = vmul.f32 %v78, %v78
    %v87 = vadd.f32 %v85, %v86
    %v88 = vld [vmem:[%s3] sm:$0x3]
    %vm89 = vcmask 523264
    %v91 = vsel %vm89, %v88, 0
    %v94 = vsel %vm89, %v87, 0
    %96 = vmatprep.subr.mxu0 0.0
    %97 = vmatpush1.xpose.msra.mxu0 0.0
    %98 = vmatprep.subr.mxu0 0.0
    %99 = vmatpush1.xpose.msra.mxu0 0.0
    %100 = vmatprep.subr.mxu0 0.0
    %101 = vmatpush1.xpose.msra.mxu0 0.0
    %102 = vmatprep.subr.mxu0 0.0
    %103 = vmatpush1.xpose.msra.mxu0 0.0
    %104 = vmatprep.subr.mxu0 0.0
    %105 = vmatpush1.xpose.msra.mxu0 0.0
    %106 = vmatprep.subr.mxu0 0.0
    %107 = vmatpush1.xpose.msra.mxu0 0.0
    %108 = vmatprep.subr.mxu0 0.0
    %109 = vmatpush1.xpose.msra.mxu0 0.0
    %110 = vmatprep.subr.mxu0 0.0
    %111 = vmatpush1.xpose.msra.mxu0 0.0
    %112 = vmatprep.subr.mxu0 0.0
    %113 = vmatpush1.xpose.msra.mxu0 0.0
    %114 = vmatprep.subr.mxu0 0.0
    %115 = vmatpush1.xpose.msra.mxu0 0.0
    %116 = vmatprep.subr.mxu0 0.0
    %117 = vmatpush1.xpose.msra.mxu0 0.0
    %118 = vmatprep.subr.mxu0 0.0
    %119 = vmatpush1.xpose.msra.mxu0 0.0
    %120 = vmatprep.subr.mxu0 0.0
    %121 = vmatpush1.xpose.msra.mxu0 0.0
    %122 = vmatprep.subr.mxu0 0.0
    %123 = vmatpush1.xpose.msra.mxu0 0.0
    %124 = vmatprep.subr.mxu0 0.0
    %125 = vmatpush1.xpose.msra.mxu0 0.0
    %126 = vmatprep.subr.mxu0 0.0
    %127 = vmatpush1.xpose.msra.mxu0 %v94
    %128 = vmatprep.subr.mxu0 0.0
    %129 = vmatpush2.xpose.msra.mxu0 0.0
    %130 = vmatprep.subr.mxu0 0.0
    %131 = vmatpush2.xpose.msra.mxu0 0.0
    %132 = vmatprep.subr.mxu0 0.0
    %133 = vmatpush2.xpose.msra.mxu0 0.0
    %134 = vmatprep.subr.mxu0 0.0
    %135 = vmatpush2.xpose.msra.mxu0 0.0
    %136 = vmatprep.subr.mxu0 0.0
    %137 = vmatpush2.xpose.msra.mxu0 0.0
    %138 = vmatprep.subr.mxu0 0.0
    %139 = vmatpush2.xpose.msra.mxu0 0.0
    %140 = vmatprep.subr.mxu0 0.0
    %141 = vmatpush2.xpose.msra.mxu0 0.0
    %142 = vmatprep.subr.mxu0 0.0
    %143 = vmatpush2.xpose.msra.mxu0 0.0
    %144 = vmatprep.subr.mxu0 0.0
    %145 = vmatpush2.xpose.msra.mxu0 0.0
    %146 = vmatprep.subr.mxu0 0.0
    %147 = vmatpush2.xpose.msra.mxu0 0.0
    %148 = vmatprep.subr.mxu0 0.0
    %149 = vmatpush2.xpose.msra.mxu0 0.0
    %150 = vmatprep.subr.mxu0 0.0
    %151 = vmatpush2.xpose.msra.mxu0 0.0
    %152 = vmatprep.subr.mxu0 0.0
    %153 = vmatpush2.xpose.msra.mxu0 0.0
    %154 = vmatprep.subr.mxu0 0.0
    %155 = vmatpush2.xpose.msra.mxu0 0.0
    %156 = vmatprep.subr.mxu0 0.0
    %157 = vmatpush2.xpose.msra.mxu0 0.0
    %158 = vmatprep.subr.mxu0 0.0
    %159 = vmatpush2.xpose.msra.mxu0 0.0
    %160 = vmatprep.mubr.f32.mxu0 0.0
    %161 = vmatmul.mubr.f32.gmra.mxu0 %v91
    %v162 = vpop.f32.mrf.mxu0
    %v163 = vadd.f32 0.0, %v162
    %v164 = vpop.f32.mrf.mxu0
    %165 = vdwg.mxu0
    %v166 = vlaneseq
    %v167 = vand.u32 %v166, 127
    %vm168 = vcmp.lt.s32.totalorder %v167, 5
    %v169 = vsel %vm168, %v163, inf
    %v170 = vlaneseq
    %v171 = vshrl.u32 %v170, 7
    %v172 = vsub.s32 0, %v171
    %v173 = vrot.slane %v169, %v172
    %175 = vbcast.lane.b32.xlu0 %v173, 256
    %v176 = vpop.permute.xlu0 %175
    %v177 = vlaneseq
    %v178 = vshrl.u32 %v177, 7
    %v179 = vsub.s32 1, %v178
    %v180 = vrot.slane %v169, %v179
    %182 = vbcast.lane.b32.xlu0 %v180, 256
    %v183 = vpop.permute.xlu0 %182
    %v186 = vunpack.c.l.s4 1966171168
    %v187 = vunpack.c.0.s8 %v186
    %v188 = vlaneseq
    %v189 = vshrl.u32 %v188, 7
    %v190 = vsub.s32 %v187, %v189
    %v191 = vrot.slane %v169, %v190
    %v192 = vcombine.high %v191, %v191
    %v194 = vunpack.c.l.s4 1966171168
    %v195 = vunpack.c.0.s8 %v194
    %v196 = vlaneseq
    %v197 = vshrl.u32 %v196, 7
    %v198 = vsub.s32 %v195, %v197
    %v199 = vrot.slane %v191, %v198
    %v201 = vunpack.c.l.s4 1966171168
    %v202 = vunpack.c.0.s8 %v201
    %v203 = vlaneseq
    %v204 = vshrl.u32 %v203, 7
    %v205 = vsub.s32 %v202, %v204
    %v206 = vrot.slane %v192, %v205
    %v207 = vlaneseq
    %v208 = vshrl.u32 %v207, 7
    %v209 = vsub.s32 0, %v208
    %v210 = vrot.slane %v199, %v209
    %v211 = vlaneseq
    %v212 = vshrl.u32 %v211, 7
    %v213 = vsub.s32 0, %v212
    %v214 = vrot.slane %v206, %v213
    %vm217 = vcmp.lt.f32.partialorder %v176, %v210
    %vm218 = vcmp.lt.f32.partialorder %v183, %v214
    %v219 = vsel %vm217, 1, 0
    %v220 = vsel %vm218, 1, 0
    %v221 = vsel %vm32, %v219, 0
    %v222 = vrot.slane %v221, 4
    %v223 = vadd.s32 %v221, %v222
    %v224 = vrot.slane %v223, 2
    %v225 = vadd.s32 %v223, %v224
    %v226 = vrot.slane %v225, 1
    %v227 = vadd.s32 %v225, %v226
    %v228 = vsel %vm32, %v220, 0
    %v229 = vrot.slane %v228, 4
    %v230 = vadd.s32 %v228, %v229
    %v231 = vrot.slane %v230, 2
    %v232 = vadd.s32 %v230, %v231
    %v233 = vrot.slane %v232, 1
    %v234 = vadd.s32 %v232, %v233
    %v235 = vand.u32 %v221, 65535
    %v236 = vshrl.u32 %v221, 16
    %v237 = vcvt.s32.f32 %v235
    %v238 = vcvt.s32.f32 %v236
    %239 = vadd.xlane.f32.xlu0 %v237
    %v240 = vpop.xlane.xlu0 %239
    %241 = vadd.xlane.f32.xlu0 %v238
    %v242 = vpop.xlane.xlu0 %241
    %v243 = vcvt.f32.s32 %v240
    %v244 = vcvt.f32.s32 %v242
    %v245 = vshll.u32 %v244, 16
    %v246 = vadd.s32 %v245, %v243
    %v247 = vand.u32 %v228, 65535
    %v248 = vshrl.u32 %v228, 16
    %v249 = vcvt.s32.f32 %v247
    %v250 = vcvt.s32.f32 %v248
    %251 = vadd.xlane.f32.xlu0 %v249
    %v252 = vpop.xlane.xlu0 %251
    %253 = vadd.xlane.f32.xlu0 %v250
    %v254 = vpop.xlane.xlu0 %253
    %v255 = vcvt.f32.s32 %v252
    %v256 = vcvt.f32.s32 %v254
    %v257 = vshll.u32 %v256, 16
    %v258 = vadd.s32 %v257, %v255
    %v259 = vsub.s32 8, %v246
    %v260 = vsub.s32 8, %v258
    %vm261 = vcmp.le.s32.totalorder %v227, 2
    %vm262 = vcmp.le.s32.totalorder %v234, 2
    %vm263 = vcmp.ge.s32.totalorder %v259, 3
    %vm264 = vcmp.ge.s32.totalorder %v260, 3
    %v265 = vsel %vm263, 1, 0
    %v266 = vsel %vm264, 1, 0
    %v267 = vlaneseq
    %v268 = vshrl.u32 %v267, 7
    %v269 = vsub.s32 %v167, %v268
    %v270 = vrot.slane %v265, %v269
    %v271 = vlaneseq
    %v272 = vshrl.u32 %v271, 7
    %v273 = vsub.s32 %v167, %v272
    %v274 = vrot.slane %v266, %v273
    %vm275 = vcmp.ne.s32.totalorder %v270, 0
    %vm276 = vcmp.ne.s32.totalorder %v274, 0
    %vm277 = vmand %vm261, %vm275
    %vm278 = vmand %vm262, %vm276
    %v279 = vrot.slane %v169, 1
    %v282 = vsel %vm277, %v169, -inf
    %v283 = vsel %vm278, %v279, -inf
    %v286 = vrot.slane %v283, 7
    %vm287 = vcmask 1041409
    %v288 = vsel %vm287, %v286, %v282
    %vm290 = vcmask 58368
    %v291 = vsel %vm290, %v288, -inf
    %292 = vmax.xlane.f32.xlu0 %v291
    %v293 = vpop.xlane.xlu0 %292
    %s294 = sld [smem:[#allocation2]]
    %v295 = vadd.f32 %v293, 1e-06
    %v296 = vrcp.pop %v295
    %v297 = vmul.f32 %v169, %v296
    %v298 = vstv %s294
    %vm299 = vcmp.gt.f32.partialorder %v297, %v298
    %v300 = vsel %vm299, 1, 0
    %v301 = vcvt.s32.f32 %v300
    %302 = vxpose.xlu0.b32.start [1/16] %v301, 128
    %303 = vxpose.xlu0.b32.cont [2/16] 0.0, 128
    %304 = vxpose.xlu0.b32.cont [3/16] 0.0, 128
    %305 = vxpose.xlu0.b32.cont [4/16] 0.0, 128
    %306 = vxpose.xlu0.b32.cont [5/16] 0.0, 128
    %307 = vxpose.xlu0.b32.cont [6/16] 0.0, 128
    %308 = vxpose.xlu0.b32.cont [7/16] 0.0, 128
    %309 = vxpose.xlu0.b32.cont [8/16] 0.0, 128
    %310 = vxpose.xlu0.b32.cont [9/16] 0.0, 128
    %311 = vxpose.xlu0.b32.cont [10/16] 0.0, 128
    %312 = vxpose.xlu0.b32.cont [11/16] 0.0, 128
    %313 = vxpose.xlu0.b32.cont [12/16] 0.0, 128
    %314 = vxpose.xlu0.b32.cont [13/16] 0.0, 128
    %315 = vxpose.xlu0.b32.cont [14/16] 0.0, 128
    %316 = vxpose.xlu0.b32.cont [15/16] 0.0, 128
    %317 = vxpose.xlu0.b32.end [16/16] 0.0, 128
    %v318 = vpop.trf.xlu0
    %v319 = vpop.trf.xlu0
    %v320 = vpop.trf.xlu0
    %v321 = vpop.trf.xlu0
    %v322 = vpop.trf.xlu0
    %v323 = vpop.trf.xlu0
    %v324 = vpop.trf.xlu0
    %v325 = vpop.trf.xlu0
    %v326 = vpop.trf.xlu0
    %v327 = vpop.trf.xlu0
    %v328 = vpop.trf.xlu0
    %v329 = vpop.trf.xlu0
    %v330 = vpop.trf.xlu0
    %v331 = vpop.trf.xlu0
    %v332 = vpop.trf.xlu0
    %v333 = vpop.trf.xlu0
    %vm334 = vcmask 15360
    %v336 = vsel %vm334, %v318, 0
    %vm338 = vcmask 1041408
    %v339 = vsel %vm338, %v88, 0
    %341 = vmatprep.subr.mxu0 0.0
    %342 = vmatpush1.msra.mxu0 0.0
    %343 = vmatprep.subr.mxu0 0.0
    %344 = vmatpush1.msra.mxu0 0.0
    %345 = vmatprep.subr.mxu0 0.0
    %346 = vmatpush1.msra.mxu0 0.0
    %347 = vmatprep.subr.mxu0 0.0
    %348 = vmatpush1.msra.mxu0 0.0
    %349 = vmatprep.subr.mxu0 0.0
    %350 = vmatpush1.msra.mxu0 0.0
    %351 = vmatprep.subr.mxu0 0.0
    %352 = vmatpush1.msra.mxu0 0.0
    %353 = vmatprep.subr.mxu0 0.0
    %354 = vmatpush1.msra.mxu0 0.0
    %355 = vmatprep.subr.mxu0 0.0
    %356 = vmatpush1.msra.mxu0 0.0
    %357 = vmatprep.subr.mxu0 0.0
    %358 = vmatpush1.msra.mxu0 0.0
    %359 = vmatprep.subr.mxu0 0.0
    %360 = vmatpush1.msra.mxu0 0.0
    %361 = vmatprep.subr.mxu0 0.0
    %362 = vmatpush1.msra.mxu0 0.0
    %363 = vmatprep.subr.mxu0 0.0
    %364 = vmatpush1.msra.mxu0 0.0
    %365 = vmatprep.subr.mxu0 0.0
    %366 = vmatpush1.msra.mxu0 0.0
    %367 = vmatprep.subr.mxu0 0.0
    %368 = vmatpush1.msra.mxu0 0.0
    %369 = vmatprep.subr.mxu0 0.0
    %370 = vmatpush1.msra.mxu0 0.0
    %371 = vmatprep.subr.mxu0 0.0
    %372 = vmatpush1.msra.mxu0 %v339
    %373 = vmatprep.subr.mxu0 0.0
    %374 = vmatpush2.msra.mxu0 0.0
    %375 = vmatprep.subr.mxu0 0.0
    %376 = vmatpush2.msra.mxu0 0.0
    %377 = vmatprep.subr.mxu0 0.0
    %378 = vmatpush2.msra.mxu0 0.0
    %379 = vmatprep.subr.mxu0 0.0
    %380 = vmatpush2.msra.mxu0 0.0
    %381 = vmatprep.subr.mxu0 0.0
    %382 = vmatpush2.msra.mxu0 0.0
    %383 = vmatprep.subr.mxu0 0.0
    %384 = vmatpush2.msra.mxu0 0.0
    %385 = vmatprep.subr.mxu0 0.0
    %386 = vmatpush2.msra.mxu0 0.0
    %387 = vmatprep.subr.mxu0 0.0
    %388 = vmatpush2.msra.mxu0 0.0
    %389 = vmatprep.subr.mxu0 0.0
    %390 = vmatpush2.msra.mxu0 0.0
    %391 = vmatprep.subr.mxu0 0.0
    %392 = vmatpush2.msra.mxu0 0.0
    %393 = vmatprep.subr.mxu0 0.0
    %394 = vmatpush2.msra.mxu0 0.0
    %395 = vmatprep.subr.mxu0 0.0
    %396 = vmatpush2.msra.mxu0 0.0
    %397 = vmatprep.subr.mxu0 0.0
    %398 = vmatpush2.msra.mxu0 0.0
    %399 = vmatprep.subr.mxu0 0.0
    %400 = vmatpush2.msra.mxu0 0.0
    %401 = vmatprep.subr.mxu0 0.0
    %402 = vmatpush2.msra.mxu0 0.0
    %403 = vmatprep.subr.mxu0 0.0
    %404 = vmatpush2.msra.mxu0 0.0
    %405 = vmatprep.mubr.f32.mxu0 0.0
    %406 = vmatmul.mubr.f32.gmra.mxu0 %v336
    %v407 = vpop.f32.mrf.mxu0
    %v408 = vadd.f32 0.0, %v407
    %v409 = vpop.f32.mrf.mxu0
    %410 = vdwg.mxu0
    %v411 = vlaneseq
    %v412 = vshrl.u32 %v411, 7
    %v413 = vsub.s32 0, %v412
    %v414 = vrot.slane %v83, %v413
    %v415 = vmul.f32 %v408, %v414
    %v416 = vlaneseq
    %v417 = vshrl.u32 %v416, 7
    %v418 = vsub.s32 0, %v417
    %v419 = vrot.slane %v81, %v418
    %v420 = vadd.f32 %v419, %v415
    %v421 = vlaneseq
    %v422 = vshrl.u32 %v421, 7
    %v423 = vsub.s32 0, %v422
    %v424 = vrot.slane %v84, %v423
    %v425 = vmul.f32 %v408, %v424
    %v426 = vlaneseq
    %v427 = vshrl.u32 %v426, 7
    %v428 = vsub.s32 0, %v427
    %v429 = vrot.slane %v82, %v428
    %v430 = vadd.f32 %v429, %v425
    %v431 = vmul.f32 %v75, %v420
    %v432 = vmul.f32 %v78, %v430
    %v433 = vsub.f32 %v431, %v432
    %v434 = vmul.f32 %v75, %v430
    %v435 = vmul.f32 %v78, %v420
    %v436 = vadd.f32 %v434, %v435
    %v437 = vlaneseq
    %v438 = vshrl.u32 %v437, 7
    %vm439 = vcmp.eq.s32.totalorder %v438, 0
    %v440 = vsel %vm439, 1.0, 2.0
    %vm441 = vcmp.eq.s32.totalorder %v438, 4
    %v442 = vsel %vm441, 1.0, %v440
    %v443 = vmul.f32 %v433, %v442
    %v444 = vpack.c.bf16 %v443, %v443
    %v445 = vmul.f32 %v436, %v442
    %v446 = vpack.c.bf16 %v445, %v445
    %v447 = vld [vmem:[%s1] sm:$0xf]
    %v448 = vld [vmem:[%s1 + $0x4] sm:$0xf]
    %449 = vxpose.xlu0.c.b16.start [1/8] %v448, 128
    %450 = vxpose.xlu0.c.b16.cont [2/8] 0, 128
    %451 = vxpose.xlu0.c.b16.cont [3/8] 0, 128
    %452 = vxpose.xlu0.c.b16.cont [4/8] 0, 128
    %453 = vxpose.xlu0.c.b16.cont [5/8] 0, 128
    %454 = vxpose.xlu0.c.b16.cont [6/8] 0, 128
    %455 = vxpose.xlu0.c.b16.cont [7/8] 0, 128
    %456 = vxpose.xlu0.c.b16.end [8/8] 0, 128
    %v457 = vpop.trf.xlu0
    %v458 = vpop.trf.xlu0
    %v459 = vpop.trf.xlu0
    %v460 = vpop.trf.xlu0
    %v461 = vpop.trf.xlu0
    %v462 = vpop.trf.xlu0
    %v463 = vpop.trf.xlu0
    %v464 = vpop.trf.xlu0
    %v466 = vsel %vm32, %v457, 0
    %v469 = vsel %vm36, %v446, 0
    %471 = vmatprep.subr.bf16.mxu0 0
    %472 = vmatpush1.bf16.msra.mxu0 0
    %473 = vmatprep.subr.bf16.mxu0 0
    %474 = vmatpush1.bf16.msra.mxu0 0
    %475 = vmatprep.subr.bf16.mxu0 0
    %476 = vmatpush1.bf16.msra.mxu0 0
    %477 = vmatprep.subr.bf16.mxu0 0
    %478 = vmatpush1.bf16.msra.mxu0 0
    %479 = vmatprep.subr.bf16.mxu0 0
    %480 = vmatpush1.bf16.msra.mxu0 0
    %481 = vmatprep.subr.bf16.mxu0 0
    %482 = vmatpush1.bf16.msra.mxu0 0
    %483 = vmatprep.subr.bf16.mxu0 0
    %484 = vmatpush1.bf16.msra.mxu0 0
    %485 = vmatprep.subr.bf16.mxu0 0
    %486 = vmatpush1.bf16.msra.mxu0 %v469
    %487 = vmatprep.subr.bf16.mxu0 0
    %488 = vmatpush2.bf16.msra.mxu0 0
    %489 = vmatprep.subr.bf16.mxu0 0
    %490 = vmatpush2.bf16.msra.mxu0 0
    %491 = vmatprep.subr.bf16.mxu0 0
    %492 = vmatpush2.bf16.msra.mxu0 0
    %493 = vmatprep.subr.bf16.mxu0 0
    %494 = vmatpush2.bf16.msra.mxu0 0
    %495 = vmatprep.subr.bf16.mxu0 0
    %496 = vmatpush2.bf16.msra.mxu0 0
    %497 = vmatprep.subr.bf16.mxu0 0
    %498 = vmatpush2.bf16.msra.mxu0 0
    %499 = vmatprep.subr.bf16.mxu0 0
    %500 = vmatpush2.bf16.msra.mxu0 0
    %501 = vmatprep.subr.bf16.mxu0 0
    %502 = vmatpush2.bf16.msra.mxu0 0
    %503 = vmatprep.mubr.bf16.mxu0 0
    %504 = vmatmul.mubr.bf16.gmra.mxu0 %v466
    %v505 = vpop.f32.mrf.mxu0
    %v506 = vadd.f32 0.0, %v505
    %v507 = vpop.f32.mrf.mxu0
    %v508 = vpop.f32.mrf.mxu0
    %v509 = vpop.f32.mrf.mxu0
    %510 = vdwg.mxu0
    %511 = vxpose.xlu0.c.b16.start [1/8] %v447, 128
    %512 = vxpose.xlu0.c.b16.cont [2/8] 0, 128
    %513 = vxpose.xlu0.c.b16.cont [3/8] 0, 128
    %514 = vxpose.xlu0.c.b16.cont [4/8] 0, 128
    %515 = vxpose.xlu0.c.b16.cont [5/8] 0, 128
    %516 = vxpose.xlu0.c.b16.cont [6/8] 0, 128
    %517 = vxpose.xlu0.c.b16.cont [7/8] 0, 128
    %518 = vxpose.xlu0.c.b16.end [8/8] 0, 128
    %v519 = vpop.trf.xlu0
    %v520 = vpop.trf.xlu0
    %v521 = vpop.trf.xlu0
    %v522 = vpop.trf.xlu0
    %v523 = vpop.trf.xlu0
    %v524 = vpop.trf.xlu0
    %v525 = vpop.trf.xlu0
    %v526 = vpop.trf.xlu0
    %v528 = vsel %vm32, %v519, 0
    %v531 = vsel %vm36, %v444, 0
    %533 = vmatprep.subr.bf16.mxu0 0
    %534 = vmatpush1.bf16.msra.mxu0 0
    %535 = vmatprep.subr.bf16.mxu0 0
    %536 = vmatpush1.bf16.msra.mxu0 0
    %537 = vmatprep.subr.bf16.mxu0 0
    %538 = vmatpush1.bf16.msra.mxu0 0
    %539 = vmatprep.subr.bf16.mxu0 0
    %540 = vmatpush1.bf16.msra.mxu0 0
    %541 = vmatprep.subr.bf16.mxu0 0
    %542 = vmatpush1.bf16.msra.mxu0 0
    %543 = vmatprep.subr.bf16.mxu0 0
    %544 = vmatpush1.bf16.msra.mxu0 0
    %545 = vmatprep.subr.bf16.mxu0 0
    %546 = vmatpush1.bf16.msra.mxu0 0
    %547 = vmatprep.subr.bf16.mxu0 0
    %548 = vmatpush1.bf16.msra.mxu0 %v531
    %549 = vmatprep.subr.bf16.mxu0 0
    %550 = vmatpush2.bf16.msra.mxu0 0
    %551 = vmatprep.subr.bf16.mxu0 0
    %552 = vmatpush2.bf16.msra.mxu0 0
    %553 = vmatprep.subr.bf16.mxu0 0
    %554 = vmatpush2.bf16.msra.mxu0 0
    %555 = vmatprep.subr.bf16.mxu0 0
    %556 = vmatpush2.bf16.msra.mxu0 0
    %557 = vmatprep.subr.bf16.mxu0 0
    %558 = vmatpush2.bf16.msra.mxu0 0
    %559 = vmatprep.subr.bf16.mxu0 0
    %560 = vmatpush2.bf16.msra.mxu0 0
    %561 = vmatprep.subr.bf16.mxu0 0
    %562 = vmatpush2.bf16.msra.mxu0 0
    %563 = vmatprep.subr.bf16.mxu0 0
    %564 = vmatpush2.bf16.msra.mxu0 0
    %565 = vmatprep.mubr.bf16.mxu0 0
    %566 = vmatmul.mubr.bf16.gmra.mxu0 %v528
    %v567 = vpop.f32.mrf.mxu0
    %v568 = vadd.f32 %v506, %v567
    %v569 = vpop.f32.mrf.mxu0
    %v570 = vpop.f32.mrf.mxu0
    %v571 = vpop.f32.mrf.mxu0
    %572 = vdwg.mxu0
    %573 = vst.msk [vmem:[#allocation3] sm:$0xff] %vm89, %v568
    // Predicated region
    $region22: #{tpu_custom_call.1} parent=1 // pred_check
      _
    $region23: #{tpu_custom_call.1} parent=1 // pred_check_branch
      %575 = sbr.rel (0) target = $region25
    $region24: #{tpu_custom_call.1} parent=1 // pred_region
      %s577 = ssub.s32 128, 128
      %578 = vsyncadd [#allocation4], %s577
      %s580 = sshll.u32 [#allocation3], 4
      %s581 = int_to_ptr.vmem [resolvable:$true] %s580
      %583 = dma.vmem_to_hbm [thread:$0]  %s581, 128, %s5, [#allocation4]
    $region25: #{tpu_custom_call.1} parent=1 // pred_fallthru
      _
    // Predicated region
    $region26: #{tpu_custom_call.1} parent=1 // pred_check
      _
    $region27: #{tpu_custom_call.1} parent=1 // pred_check_branch
      %585 = sbr.rel (0) target = $region29
    $region28: #{tpu_custom_call.1} parent=1 // pred_region
      %586 = dma.done [#allocation4], 128
    $region29: #{tpu_custom_call.1} parent=1 // pred_fallthru
      _
    %587 = vsyncpa [#allocation4], 1

</llo_original>
